<compile_context>
chip_gen: v5e
topology: v5e:2x2
jax: 0.10.0
libtpu: 0.0.40
codegen_flags: <defaults>
</compile_context>

<pallas_src>
import functools

import jax
import jax.numpy as jnp
from jax.experimental import pallas as pl
from jax.experimental.pallas import tpu as pltpu

INDEX = [0, 2, 5, 8, 10, 12, 14, 17, 19, 21, 26, 28, 30]
NUM_CLASSES = INDEX[-1]        # 30
NUM_GROUPS = len(INDEX) - 1    # 12


def _round_up(x, m):
    return (x + m - 1) // m * m


def _group_matrices():
    """E[g, k] = 1 iff class k is in group g; G[j, k] = 1 iff j, k share a group.

    Built from iotas + compares (a handful of VPU ops on <=1 vreg) so no
    constant tables need to be shipped through HBM.
    """
    # E: (NUM_GROUPS, NUM_CLASSES)
    g_row = jax.lax.broadcasted_iota(jnp.int32, (NUM_GROUPS, NUM_CLASSES), 0)
    col = jax.lax.broadcasted_iota(jnp.int32, (NUM_GROUPS, NUM_CLASSES), 1)
    gid_col = jnp.zeros((NUM_GROUPS, NUM_CLASSES), jnp.int32)
    for b in INDEX[1:-1]:
        gid_col = gid_col + (col >= b).astype(jnp.int32)
    e_mat = (g_row == gid_col).astype(jnp.float32)

    # G: (NUM_CLASSES, NUM_CLASSES)
    r = jax.lax.broadcasted_iota(jnp.int32, (NUM_CLASSES, NUM_CLASSES), 0)
    c = jax.lax.broadcasted_iota(jnp.int32, (NUM_CLASSES, NUM_CLASSES), 1)
    gid_r = jnp.zeros((NUM_CLASSES, NUM_CLASSES), jnp.int32)
    gid_c = jnp.zeros((NUM_CLASSES, NUM_CLASSES), jnp.int32)
    for b in INDEX[1:-1]:
        gid_r = gid_r + (r >= b).astype(jnp.int32)
        gid_c = gid_c + (c >= b).astype(jnp.int32)
    g_mat = (gid_r == gid_c).astype(jnp.float32)
    return e_mat, g_mat


def _dense_ce_ml_kernel(pred_ref, label_ref, out_ref, *, inv_n):
    i = pl.program_id(0)

    pred = pred_ref[...]      # (TN, C) f32
    label = label_ref[...]    # (TN, C) f32

    e_mat, g_mat = _group_matrices()

    # Per-group maxima: 12 tiny cross-lane reductions (2..5 lanes each), then
    # expanded back to full class width on the MXU.  Any value >= the true
    # group max keeps exp() stable, so this matmul is precision-insensitive.
    gmax = jnp.concatenate(
        [jnp.max(pred[:, s:e], axis=1, keepdims=True)
         for s, e in zip(INDEX[:-1], INDEX[1:])],
        axis=1)                                                         # (TN, NG)
    m_full = jnp.dot(gmax, e_mat, preferred_element_type=jnp.float32)   # (TN, C)

    shifted = pred - m_full
    z = jnp.exp(shifted)                                                # (TN, C)

    # Segment (per-group) sums of exp on the MXU:
    #   denom[:, k] = sum_{j in group(k)} z[:, j]
    # Split z into a bf16-exact high part and a small residual so the sum is
    # f32-accurate even if the MXU truncates f32 operands to bf16.
    z_hi = z.astype(jnp.bfloat16).astype(jnp.float32)
    z_lo = z - z_hi
    denom = (jnp.dot(z_hi, g_mat, preferred_element_type=jnp.float32)
             + jnp.dot(z_lo, g_mat, preferred_element_type=jnp.float32))  # (TN, C)

    # -log(groupwise_softmax(pred))[k] = log(denom[k]) - shifted[k]
    per_elem = label * (jnp.log(denom) - shifted)
    block_sum = jnp.sum(per_elem)

    @pl.when(i == 0)
    def _init():
        out_ref[0, 0] = 0.0

    out_ref[0, 0] += block_sum * inv_n


def dense_cross_entropy_multi_label(pred, label, block_rows=1024):
    n, c = pred.shape
    assert c == NUM_CLASSES, f"expected {NUM_CLASSES} classes, got {c}"
    pred = pred.astype(jnp.float32)
    label = label.astype(jnp.float32)

    tn = min(block_rows, _round_up(n, 8))
    n_pad = _round_up(n, tn)
    if n_pad != n:
        pad = ((0, n_pad - n), (0, 0))
        pred = jnp.pad(pred, pad)     # zero rows: label == 0 -> contribute 0 loss
        label = jnp.pad(label, pad)

    grid = (n_pad // tn,)
    kernel = functools.partial(_dense_ce_ml_kernel, inv_n=1.0 / n)
    out = pl.pallas_call(
        kernel,
        out_shape=jax.ShapeDtypeStruct((1, 1), jnp.float32),
        grid=grid,
        in_specs=[
            pl.BlockSpec((tn, NUM_CLASSES), lambda i: (i, 0)),
            pl.BlockSpec((tn, NUM_CLASSES), lambda i: (i, 0)),
        ],
        out_specs=pl.BlockSpec((1, 1), lambda i: (0, 0),
                               memory_space=pltpu.SMEM),
        compiler_params=pltpu.CompilerParams(
            dimension_semantics=("arbitrary",)),
    )(pred, label)
    return out[0, 0]


def _reference(pred, label):
    # Pure-JAX reference reproducing the PyTorch forward.
    pred = pred.astype(jnp.float32)
    label = label.astype(jnp.float32)
    cols = []
    for i in range(NUM_GROUPS):
        s, e = INDEX[i], INDEX[i + 1]
        cols.append(jax.nn.softmax(pred[:, s:e], axis=1))
    p = jnp.concatenate(cols, axis=1)
    loss = (-jnp.log(p) * label).sum(axis=1)
    return loss.mean()


if __name__ == "__main__":
    key = jax.random.PRNGKey(0)
    k1, k2 = jax.random.split(key)

    N = 8
    pred = jax.random.normal(k1, (N, NUM_CLASSES), dtype=jnp.float32)

    # Deterministic multi-label target: one-hot inside each group.
    label = jnp.zeros((N, NUM_CLASSES), dtype=jnp.float32)
    keys = jax.random.split(k2, NUM_GROUPS)
    for i in range(NUM_GROUPS):
        s, e = INDEX[i], INDEX[i + 1]
        idx = jax.random.randint(keys[i], (N,), 0, e - s)
        onehot = jax.nn.one_hot(idx, e - s, dtype=jnp.float32)
        label = label.at[:, s:e].set(onehot)

    loss = jax.block_until_ready(dense_cross_entropy_multi_label(pred, label))
    ref = _reference(pred, label)
    assert jnp.allclose(loss, ref, atol=1e-4, rtol=1e-4), (loss, ref)

    # Also exercise the multi-block + padded path (batch not a block multiple).
    N2 = 13
    pred2 = jax.random.normal(jax.random.PRNGKey(3), (N2, NUM_CLASSES),
                              dtype=jnp.float32)
    label2 = (jax.random.uniform(jax.random.PRNGKey(4),
                                 (N2, NUM_CLASSES)) < 0.3).astype(jnp.float32)
    loss2 = jax.block_until_ready(
        dense_cross_entropy_multi_label(pred2, label2, block_rows=8))
    ref2 = _reference(pred2, label2)
    assert jnp.allclose(loss2, ref2, atol=1e-4, rtol=1e-4), (loss2, ref2)

    print("KERNEL_OK")
</pallas_src>

<mosaic_0001>
module attributes {stable_mosaic.version = 11 : i64} {
  func.func @_dense_ce_ml_kernel(%arg0: i32, %arg1: memref<8x30xf32, #tpu.memory_space<vmem>>, %arg2: memref<8x30xf32, #tpu.memory_space<vmem>>, %arg3: memref<1x1xf32, #tpu.memory_space<smem>>) attributes {dimension_semantics = [#tpu.dimension_semantics<arbitrary>], iteration_bounds = array<i64: 1>, scalar_prefetch = 0 : i64, scratch_operands = 0 : i64, tpu.core_type = #tpu.core_type<tc>, window_params = [{transform_indices = @transform_0, window_bounds = array<i64: 8, 30>}, {transform_indices = @transform_1, window_bounds = array<i64: 8, 30>}, {transform_indices = @transform_2, window_bounds = array<i64: 1, 1>}]} {
    %c0 = arith.constant 0 : index
    %c0_0 = arith.constant 0 : index
    %0 = vector.load %arg1[%c0, %c0_0] : memref<8x30xf32, #tpu.memory_space<vmem>>, vector<8x30xf32>
    %c0_1 = arith.constant 0 : index
    %c0_2 = arith.constant 0 : index
    %1 = vector.load %arg2[%c0_1, %c0_2] : memref<8x30xf32, #tpu.memory_space<vmem>>, vector<8x30xf32>
    %2 = tpu.iota {dimensions = array<i32: 0>} : vector<12x30xi32>
    %3 = tpu.iota {dimensions = array<i32: 1>} : vector<12x30xi32>
    %c0_i32 = arith.constant 0 : i32
    %4 = vector.broadcast %c0_i32 : i32 to vector<12x30xi32>
    %c2_i32 = arith.constant 2 : i32
    %5 = vector.broadcast %c2_i32 : i32 to vector<12x30xi32>
    %6 = arith.cmpi sge, %3, %5 : vector<12x30xi32>
    %7 = arith.extui %6 : vector<12x30xi1> to vector<12x30xi32>
    %8 = arith.addi %4, %7 : vector<12x30xi32>
    %c5_i32 = arith.constant 5 : i32
    %9 = vector.broadcast %c5_i32 : i32 to vector<12x30xi32>
    %10 = arith.cmpi sge, %3, %9 : vector<12x30xi32>
    %11 = arith.extui %10 : vector<12x30xi1> to vector<12x30xi32>
    %12 = arith.addi %8, %11 : vector<12x30xi32>
    %c8_i32 = arith.constant 8 : i32
    %13 = vector.broadcast %c8_i32 : i32 to vector<12x30xi32>
    %14 = arith.cmpi sge, %3, %13 : vector<12x30xi32>
    %15 = arith.extui %14 : vector<12x30xi1> to vector<12x30xi32>
    %16 = arith.addi %12, %15 : vector<12x30xi32>
    %c10_i32 = arith.constant 10 : i32
    %17 = vector.broadcast %c10_i32 : i32 to vector<12x30xi32>
    %18 = arith.cmpi sge, %3, %17 : vector<12x30xi32>
    %19 = arith.extui %18 : vector<12x30xi1> to vector<12x30xi32>
    %20 = arith.addi %16, %19 : vector<12x30xi32>
    %c12_i32 = arith.constant 12 : i32
    %21 = vector.broadcast %c12_i32 : i32 to vector<12x30xi32>
    %22 = arith.cmpi sge, %3, %21 : vector<12x30xi32>
    %23 = arith.extui %22 : vector<12x30xi1> to vector<12x30xi32>
    %24 = arith.addi %20, %23 : vector<12x30xi32>
    %c14_i32 = arith.constant 14 : i32
    %25 = vector.broadcast %c14_i32 : i32 to vector<12x30xi32>
    %26 = arith.cmpi sge, %3, %25 : vector<12x30xi32>
    %27 = arith.extui %26 : vector<12x30xi1> to vector<12x30xi32>
    %28 = arith.addi %24, %27 : vector<12x30xi32>
    %c17_i32 = arith.constant 17 : i32
    %29 = vector.broadcast %c17_i32 : i32 to vector<12x30xi32>
    %30 = arith.cmpi sge, %3, %29 : vector<12x30xi32>
    %31 = arith.extui %30 : vector<12x30xi1> to vector<12x30xi32>
    %32 = arith.addi %28, %31 : vector<12x30xi32>
    %c19_i32 = arith.constant 19 : i32
    %33 = vector.broadcast %c19_i32 : i32 to vector<12x30xi32>
    %34 = arith.cmpi sge, %3, %33 : vector<12x30xi32>
    %35 = arith.extui %34 : vector<12x30xi1> to vector<12x30xi32>
    %36 = arith.addi %32, %35 : vector<12x30xi32>
    %c21_i32 = arith.constant 21 : i32
    %37 = vector.broadcast %c21_i32 : i32 to vector<12x30xi32>
    %38 = arith.cmpi sge, %3, %37 : vector<12x30xi32>
    %39 = arith.extui %38 : vector<12x30xi1> to vector<12x30xi32>
    %40 = arith.addi %36, %39 : vector<12x30xi32>
    %c26_i32 = arith.constant 26 : i32
    %41 = vector.broadcast %c26_i32 : i32 to vector<12x30xi32>
    %42 = arith.cmpi sge, %3, %41 : vector<12x30xi32>
    %43 = arith.extui %42 : vector<12x30xi1> to vector<12x30xi32>
    %44 = arith.addi %40, %43 : vector<12x30xi32>
    %c28_i32 = arith.constant 28 : i32
    %45 = vector.broadcast %c28_i32 : i32 to vector<12x30xi32>
    %46 = arith.cmpi sge, %3, %45 : vector<12x30xi32>
    %47 = arith.extui %46 : vector<12x30xi1> to vector<12x30xi32>
    %48 = arith.addi %44, %47 : vector<12x30xi32>
    %49 = arith.cmpi eq, %2, %48 : vector<12x30xi32>
    %50 = arith.extui %49 : vector<12x30xi1> to vector<12x30xi32>
    %51 = arith.sitofp %50 : vector<12x30xi32> to vector<12x30xf32>
    %52 = tpu.iota {dimensions = array<i32: 0>} : vector<30x30xi32>
    %53 = tpu.iota {dimensions = array<i32: 1>} : vector<30x30xi32>
    %c0_i32_3 = arith.constant 0 : i32
    %54 = vector.broadcast %c0_i32_3 : i32 to vector<30x30xi32>
    %c0_i32_4 = arith.constant 0 : i32
    %55 = vector.broadcast %c0_i32_4 : i32 to vector<30x30xi32>
    %c2_i32_5 = arith.constant 2 : i32
    %56 = vector.broadcast %c2_i32_5 : i32 to vector<30x30xi32>
    %57 = arith.cmpi sge, %52, %56 : vector<30x30xi32>
    %58 = arith.extui %57 : vector<30x30xi1> to vector<30x30xi32>
    %59 = arith.addi %54, %58 : vector<30x30xi32>
    %c2_i32_6 = arith.constant 2 : i32
    %60 = vector.broadcast %c2_i32_6 : i32 to vector<30x30xi32>
    %61 = arith.cmpi sge, %53, %60 : vector<30x30xi32>
    %62 = arith.extui %61 : vector<30x30xi1> to vector<30x30xi32>
    %63 = arith.addi %55, %62 : vector<30x30xi32>
    %c5_i32_7 = arith.constant 5 : i32
    %64 = vector.broadcast %c5_i32_7 : i32 to vector<30x30xi32>
    %65 = arith.cmpi sge, %52, %64 : vector<30x30xi32>
    %66 = arith.extui %65 : vector<30x30xi1> to vector<30x30xi32>
    %67 = arith.addi %59, %66 : vector<30x30xi32>
    %c5_i32_8 = arith.constant 5 : i32
    %68 = vector.broadcast %c5_i32_8 : i32 to vector<30x30xi32>
    %69 = arith.cmpi sge, %53, %68 : vector<30x30xi32>
    %70 = arith.extui %69 : vector<30x30xi1> to vector<30x30xi32>
    %71 = arith.addi %63, %70 : vector<30x30xi32>
    %c8_i32_9 = arith.constant 8 : i32
    %72 = vector.broadcast %c8_i32_9 : i32 to vector<30x30xi32>
    %73 = arith.cmpi sge, %52, %72 : vector<30x30xi32>
    %74 = arith.extui %73 : vector<30x30xi1> to vector<30x30xi32>
    %75 = arith.addi %67, %74 : vector<30x30xi32>
    %c8_i32_10 = arith.constant 8 : i32
    %76 = vector.broadcast %c8_i32_10 : i32 to vector<30x30xi32>
    %77 = arith.cmpi sge, %53, %76 : vector<30x30xi32>
    %78 = arith.extui %77 : vector<30x30xi1> to vector<30x30xi32>
    %79 = arith.addi %71, %78 : vector<30x30xi32>
    %c10_i32_11 = arith.constant 10 : i32
    %80 = vector.broadcast %c10_i32_11 : i32 to vector<30x30xi32>
    %81 = arith.cmpi sge, %52, %80 : vector<30x30xi32>
    %82 = arith.extui %81 : vector<30x30xi1> to vector<30x30xi32>
    %83 = arith.addi %75, %82 : vector<30x30xi32>
    %c10_i32_12 = arith.constant 10 : i32
    %84 = vector.broadcast %c10_i32_12 : i32 to vector<30x30xi32>
    %85 = arith.cmpi sge, %53, %84 : vector<30x30xi32>
    %86 = arith.extui %85 : vector<30x30xi1> to vector<30x30xi32>
    %87 = arith.addi %79, %86 : vector<30x30xi32>
    %c12_i32_13 = arith.constant 12 : i32
    %88 = vector.broadcast %c12_i32_13 : i32 to vector<30x30xi32>
    %89 = arith.cmpi sge, %52, %88 : vector<30x30xi32>
    %90 = arith.extui %89 : vector<30x30xi1> to vector<30x30xi32>
    %91 = arith.addi %83, %90 : vector<30x30xi32>
    %c12_i32_14 = arith.constant 12 : i32
    %92 = vector.broadcast %c12_i32_14 : i32 to vector<30x30xi32>
    %93 = arith.cmpi sge, %53, %92 : vector<30x30xi32>
    %94 = arith.extui %93 : vector<30x30xi1> to vector<30x30xi32>
    %95 = arith.addi %87, %94 : vector<30x30xi32>
    %c14_i32_15 = arith.constant 14 : i32
    %96 = vector.broadcast %c14_i32_15 : i32 to vector<30x30xi32>
    %97 = arith.cmpi sge, %52, %96 : vector<30x30xi32>
    %98 = arith.extui %97 : vector<30x30xi1> to vector<30x30xi32>
    %99 = arith.addi %91, %98 : vector<30x30xi32>
    %c14_i32_16 = arith.constant 14 : i32
    %100 = vector.broadcast %c14_i32_16 : i32 to vector<30x30xi32>
    %101 = arith.cmpi sge, %53, %100 : vector<30x30xi32>
    %102 = arith.extui %101 : vector<30x30xi1> to vector<30x30xi32>
    %103 = arith.addi %95, %102 : vector<30x30xi32>
    %c17_i32_17 = arith.constant 17 : i32
    %104 = vector.broadcast %c17_i32_17 : i32 to vector<30x30xi32>
    %105 = arith.cmpi sge, %52, %104 : vector<30x30xi32>
    %106 = arith.extui %105 : vector<30x30xi1> to vector<30x30xi32>
    %107 = arith.addi %99, %106 : vector<30x30xi32>
    %c17_i32_18 = arith.constant 17 : i32
    %108 = vector.broadcast %c17_i32_18 : i32 to vector<30x30xi32>
    %109 = arith.cmpi sge, %53, %108 : vector<30x30xi32>
    %110 = arith.extui %109 : vector<30x30xi1> to vector<30x30xi32>
    %111 = arith.addi %103, %110 : vector<30x30xi32>
    %c19_i32_19 = arith.constant 19 : i32
    %112 = vector.broadcast %c19_i32_19 : i32 to vector<30x30xi32>
    %113 = arith.cmpi sge, %52, %112 : vector<30x30xi32>
    %114 = arith.extui %113 : vector<30x30xi1> to vector<30x30xi32>
    %115 = arith.addi %107, %114 : vector<30x30xi32>
    %c19_i32_20 = arith.constant 19 : i32
    %116 = vector.broadcast %c19_i32_20 : i32 to vector<30x30xi32>
    %117 = arith.cmpi sge, %53, %116 : vector<30x30xi32>
    %118 = arith.extui %117 : vector<30x30xi1> to vector<30x30xi32>
    %119 = arith.addi %111, %118 : vector<30x30xi32>
    %c21_i32_21 = arith.constant 21 : i32
    %120 = vector.broadcast %c21_i32_21 : i32 to vector<30x30xi32>
    %121 = arith.cmpi sge, %52, %120 : vector<30x30xi32>
    %122 = arith.extui %121 : vector<30x30xi1> to vector<30x30xi32>
    %123 = arith.addi %115, %122 : vector<30x30xi32>
    %c21_i32_22 = arith.constant 21 : i32
    %124 = vector.broadcast %c21_i32_22 : i32 to vector<30x30xi32>
    %125 = arith.cmpi sge, %53, %124 : vector<30x30xi32>
    %126 = arith.extui %125 : vector<30x30xi1> to vector<30x30xi32>
    %127 = arith.addi %119, %126 : vector<30x30xi32>
    %c26_i32_23 = arith.constant 26 : i32
    %128 = vector.broadcast %c26_i32_23 : i32 to vector<30x30xi32>
    %129 = arith.cmpi sge, %52, %128 : vector<30x30xi32>
    %130 = arith.extui %129 : vector<30x30xi1> to vector<30x30xi32>
    %131 = arith.addi %123, %130 : vector<30x30xi32>
    %c26_i32_24 = arith.constant 26 : i32
    %132 = vector.broadcast %c26_i32_24 : i32 to vector<30x30xi32>
    %133 = arith.cmpi sge, %53, %132 : vector<30x30xi32>
    %134 = arith.extui %133 : vector<30x30xi1> to vector<30x30xi32>
    %135 = arith.addi %127, %134 : vector<30x30xi32>
    %c28_i32_25 = arith.constant 28 : i32
    %136 = vector.broadcast %c28_i32_25 : i32 to vector<30x30xi32>
    %137 = arith.cmpi sge, %52, %136 : vector<30x30xi32>
    %138 = arith.extui %137 : vector<30x30xi1> to vector<30x30xi32>
    %139 = arith.addi %131, %138 : vector<30x30xi32>
    %c28_i32_26 = arith.constant 28 : i32
    %140 = vector.broadcast %c28_i32_26 : i32 to vector<30x30xi32>
    %141 = arith.cmpi sge, %53, %140 : vector<30x30xi32>
    %142 = arith.extui %141 : vector<30x30xi1> to vector<30x30xi32>
    %143 = arith.addi %135, %142 : vector<30x30xi32>
    %144 = arith.cmpi eq, %139, %143 : vector<30x30xi32>
    %145 = arith.extui %144 : vector<30x30xi1> to vector<30x30xi32>
    %146 = arith.sitofp %145 : vector<30x30xi32> to vector<30x30xf32>
    %147 = vector.extract_strided_slice %0 {offsets = [0, 0], sizes = [8, 2], strides = [1, 1]} : vector<8x30xf32> to vector<8x2xf32>
    %cst = arith.constant dense<0xFF800000> : vector<8xf32>
    %148 = vector.multi_reduction <maximumf>, %147, %cst [1] : vector<8x2xf32> to vector<8xf32>
    %149 = vector.shape_cast %148 : vector<8xf32> to vector<8x1xf32>
    %150 = vector.extract_strided_slice %0 {offsets = [0, 2], sizes = [8, 3], strides = [1, 1]} : vector<8x30xf32> to vector<8x3xf32>
    %cst_27 = arith.constant dense<0xFF800000> : vector<8xf32>
    %151 = vector.multi_reduction <maximumf>, %150, %cst_27 [1] : vector<8x3xf32> to vector<8xf32>
    %152 = vector.shape_cast %151 : vector<8xf32> to vector<8x1xf32>
    %153 = vector.extract_strided_slice %0 {offsets = [0, 5], sizes = [8, 3], strides = [1, 1]} : vector<8x30xf32> to vector<8x3xf32>
    %cst_28 = arith.constant dense<0xFF800000> : vector<8xf32>
    %154 = vector.multi_reduction <maximumf>, %153, %cst_28 [1] : vector<8x3xf32> to vector<8xf32>
    %155 = vector.shape_cast %154 : vector<8xf32> to vector<8x1xf32>
    %156 = vector.extract_strided_slice %0 {offsets = [0, 8], sizes = [8, 2], strides = [1, 1]} : vector<8x30xf32> to vector<8x2xf32>
    %cst_29 = arith.constant dense<0xFF800000> : vector<8xf32>
    %157 = vector.multi_reduction <maximumf>, %156, %cst_29 [1] : vector<8x2xf32> to vector<8xf32>
    %158 = vector.shape_cast %157 : vector<8xf32> to vector<8x1xf32>
    %159 = vector.extract_strided_slice %0 {offsets = [0, 10], sizes = [8, 2], strides = [1, 1]} : vector<8x30xf32> to vector<8x2xf32>
    %cst_30 = arith.constant dense<0xFF800000> : vector<8xf32>
    %160 = vector.multi_reduction <maximumf>, %159, %cst_30 [1] : vector<8x2xf32> to vector<8xf32>
    %161 = vector.shape_cast %160 : vector<8xf32> to vector<8x1xf32>
    %162 = vector.extract_strided_slice %0 {offsets = [0, 12], sizes = [8, 2], strides = [1, 1]} : vector<8x30xf32> to vector<8x2xf32>
    %cst_31 = arith.constant dense<0xFF800000> : vector<8xf32>
    %163 = vector.multi_reduction <maximumf>, %162, %cst_31 [1] : vector<8x2xf32> to vector<8xf32>
    %164 = vector.shape_cast %163 : vector<8xf32> to vector<8x1xf32>
    %165 = vector.extract_strided_slice %0 {offsets = [0, 14], sizes = [8, 3], strides = [1, 1]} : vector<8x30xf32> to vector<8x3xf32>
    %cst_32 = arith.constant dense<0xFF800000> : vector<8xf32>
    %166 = vector.multi_reduction <maximumf>, %165, %cst_32 [1] : vector<8x3xf32> to vector<8xf32>
    %167 = vector.shape_cast %166 : vector<8xf32> to vector<8x1xf32>
    %168 = vector.extract_strided_slice %0 {offsets = [0, 17], sizes = [8, 2], strides = [1, 1]} : vector<8x30xf32> to vector<8x2xf32>
    %cst_33 = arith.constant dense<0xFF800000> : vector<8xf32>
    %169 = vector.multi_reduction <maximumf>, %168, %cst_33 [1] : vector<8x2xf32> to vector<8xf32>
    %170 = vector.shape_cast %169 : vector<8xf32> to vector<8x1xf32>
    %171 = vector.extract_strided_slice %0 {offsets = [0, 19], sizes = [8, 2], strides = [1, 1]} : vector<8x30xf32> to vector<8x2xf32>
    %cst_34 = arith.constant dense<0xFF800000> : vector<8xf32>
    %172 = vector.multi_reduction <maximumf>, %171, %cst_34 [1] : vector<8x2xf32> to vector<8xf32>
    %173 = vector.shape_cast %172 : vector<8xf32> to vector<8x1xf32>
    %174 = vector.extract_strided_slice %0 {offsets = [0, 21], sizes = [8, 5], strides = [1, 1]} : vector<8x30xf32> to vector<8x5xf32>
    %cst_35 = arith.constant dense<0xFF800000> : vector<8xf32>
    %175 = vector.multi_reduction <maximumf>, %174, %cst_35 [1] : vector<8x5xf32> to vector<8xf32>
    %176 = vector.shape_cast %175 : vector<8xf32> to vector<8x1xf32>
    %177 = vector.extract_strided_slice %0 {offsets = [0, 26], sizes = [8, 2], strides = [1, 1]} : vector<8x30xf32> to vector<8x2xf32>
    %cst_36 = arith.constant dense<0xFF800000> : vector<8xf32>
    %178 = vector.multi_reduction <maximumf>, %177, %cst_36 [1] : vector<8x2xf32> to vector<8xf32>
    %179 = vector.shape_cast %178 : vector<8xf32> to vector<8x1xf32>
    %180 = vector.extract_strided_slice %0 {offsets = [0, 28], sizes = [8, 2], strides = [1, 1]} : vector<8x30xf32> to vector<8x2xf32>
    %cst_37 = arith.constant dense<0xFF800000> : vector<8xf32>
    %181 = vector.multi_reduction <maximumf>, %180, %cst_37 [1] : vector<8x2xf32> to vector<8xf32>
    %182 = vector.shape_cast %181 : vector<8xf32> to vector<8x1xf32>
    %183 = tpu.concatenate %149, %152, %155, %158, %161, %164, %167, %170, %173, %176, %179, %182 in 1 : vector<8x1xf32>, vector<8x1xf32>, vector<8x1xf32>, vector<8x1xf32>, vector<8x1xf32>, vector<8x1xf32>, vector<8x1xf32>, vector<8x1xf32>, vector<8x1xf32>, vector<8x1xf32>, vector<8x1xf32>, vector<8x1xf32> -> vector<8x12xf32>
    %cst_38 = arith.constant dense<0.000000e+00> : vector<8x30xf32>
    %184 = tpu.matmul %183, %51, %cst_38 {dimension_numbers = #tpu.dot_dimension_numbers<[1], [0], [0], [1], [0, 0, 1, 1], [], []>} : vector<8x12xf32>, vector<12x30xf32>, vector<8x30xf32> -> vector<8x30xf32>
    %185 = arith.subf %0, %184 : vector<8x30xf32>
    %186 = math.exp %185 : vector<8x30xf32>
    %187 = arith.truncf %186 : vector<8x30xf32> to vector<8x30xbf16>
    %188 = arith.extf %187 : vector<8x30xbf16> to vector<8x30xf32>
    %189 = arith.subf %186, %188 : vector<8x30xf32>
    %cst_39 = arith.constant dense<0.000000e+00> : vector<8x30xf32>
    %190 = tpu.matmul %188, %146, %cst_39 {dimension_numbers = #tpu.dot_dimension_numbers<[1], [0], [0], [1], [0, 0, 1, 1], [], []>} : vector<8x30xf32>, vector<30x30xf32>, vector<8x30xf32> -> vector<8x30xf32>
    %cst_40 = arith.constant dense<0.000000e+00> : vector<8x30xf32>
    %191 = tpu.matmul %189, %146, %cst_40 {dimension_numbers = #tpu.dot_dimension_numbers<[1], [0], [0], [1], [0, 0, 1, 1], [], []>} : vector<8x30xf32>, vector<30x30xf32>, vector<8x30xf32> -> vector<8x30xf32>
    %192 = arith.addf %190, %191 : vector<8x30xf32>
    %193 = math.log %192 : vector<8x30xf32>
    %194 = arith.subf %193, %185 : vector<8x30xf32>
    %195 = arith.mulf %1, %194 : vector<8x30xf32>
    %196 = vector.shape_cast %195 : vector<8x30xf32> to vector<1x8x30xf32>
    %cst_41 = arith.constant dense<0.000000e+00> : vector<1xf32>
    %197 = vector.multi_reduction <add>, %196, %cst_41 [1, 2] : vector<1x8x30xf32> to vector<1xf32>
    %198 = vector.shape_cast %197 : vector<1xf32> to vector<1x1x1xf32>
    %199 = vector.extract %198[0, 0, 0] : f32 from vector<1x1x1xf32>
    %c0_i32_42 = arith.constant 0 : i32
    %200 = arith.cmpi eq, %arg0, %c0_i32_42 : i32
    %201 = arith.extui %200 : i1 to i32
    %c0_i32_43 = arith.constant 0 : i32
    %202 = arith.cmpi ne, %201, %c0_i32_43 : i32
    scf.if %202 {
      %cst_49 = arith.constant 0.000000e+00 : f32
      %c0_50 = arith.constant 0 : index
      %c0_51 = arith.constant 0 : index
      %207 = memref.load %arg3[%c0_50, %c0_51] : memref<1x1xf32, #tpu.memory_space<smem>>
      memref.store %cst_49, %arg3[%c0_50, %c0_51] : memref<1x1xf32, #tpu.memory_space<smem>>
    } else {
    }
    %c0_44 = arith.constant 0 : index
    %c0_45 = arith.constant 0 : index
    %203 = memref.load %arg3[%c0_44, %c0_45] : memref<1x1xf32, #tpu.memory_space<smem>>
    %cst_46 = arith.constant 1.250000e-01 : f32
    %204 = arith.mulf %199, %cst_46 : f32
    %205 = arith.addf %203, %204 : f32
    %c0_47 = arith.constant 0 : index
    %c0_48 = arith.constant 0 : index
    %206 = memref.load %arg3[%c0_47, %c0_48] : memref<1x1xf32, #tpu.memory_space<smem>>
    memref.store %205, %arg3[%c0_47, %c0_48] : memref<1x1xf32, #tpu.memory_space<smem>>
    return
  }
  func.func @transform_0(%arg0: i32) -> (i32, i32) {
    %c0_i32 = arith.constant 0 : i32
    %c0_i32_0 = arith.constant 0 : i32
    return %arg0, %c0_i32 : i32, i32
  }
  func.func @transform_1(%arg0: i32) -> (i32, i32) {
    %c0_i32 = arith.constant 0 : i32
    %c0_i32_0 = arith.constant 0 : i32
    return %arg0, %c0_i32 : i32, i32
  }
  func.func @transform_2(%arg0: i32) -> (i32, i32) {
    %c0_i32 = arith.constant 0 : i32
    %c0_i32_0 = arith.constant 0 : i32
    %c0_i32_1 = arith.constant 0 : i32
    return %c0_i32, %c0_i32_0 : i32, i32
  }
}

</mosaic_0001>

<llo_original>
// kernel: tpu_custom_call.1
$region0: #{tpu_custom_call.1}
  #allocation0 [shape = 'u32[]', space=smem, size = 0x4, offset = 0x4, fixed_abs, tag = 'smem constant byte address 0x4 - core index']
  #allocation1 [shape = 'u32[72,128]{1,0:T(1,128)}', space=vmem, size = 0x9000, scoped, tag = 'internal scratch']
  %s0 = inlined_call_operand.hbm [shape: f32[8,30], index: 0, kind: input, shape index: {}]
  %s1 = inlined_call_operand.hbm [shape: f32[8,30], index: 1, kind: input, shape index: {}]
  %s2 = inlined_call_operand.hbm [shape: f32[1,1], index: 2, kind: output, shape index: {}]
  %s3 = sld [smem:[#allocation0]]
  $region30: #{tpu_custom_call.1} parent=0
    _
  %s5 = ssub.s32 1, %s3
  %s6 = scalar_select 0, %s5, %s3
  $region1: #{tpu_custom_call.1} parent=0
    #allocation2 [shape = 'u8[4096]{0}', space=vmem, size = 0x1000, scoped, tag = 'input window, operand 0, single buffered']
    #allocation3 [shape = 's32[1]{0}', space=sflag, size = 0x4, scoped, tag = 'scoped memory for tpu_custom_call.1']
    #allocation4 [shape = 's32[1]{0}', space=sflag, size = 0x4, scoped, tag = 'scoped memory for tpu_custom_call.1']
    #allocation5 [shape = 'u8[4096]{0}', space=vmem, size = 0x1000, scoped, tag = 'input window, operand 1, single buffered']
    #allocation6 [shape = 's32[1]{0}', space=sflag, size = 0x4, scoped, tag = 'scoped memory for tpu_custom_call.1']
    #allocation7 [shape = 'u8[512]{0}', space=smem, size = 0x200, scoped, tag = 'output window, operand 0, single buffered']
    %7 = vsyncpa [#allocation3], 0
    %8 = vsyncpa [#allocation6], 0
    %9 = vsyncpa [#allocation4], 0
    // Predicated region
    $region2: #{tpu_custom_call.1} parent=1 // pred_check
      _
    $region3: #{tpu_custom_call.1} parent=1 // pred_check_branch
      %11 = sbr.rel (0) target = $region5
    $region4: #{tpu_custom_call.1} parent=1 // pred_region
      %13 = vsyncadd [#allocation3], 0
      %s15 = sshll.u32 %s0, 4
      %s16 = int_to_ptr.hbm [resolvable:$true] %s15
      %s17 = sshll.u32 [#allocation2], 4
      %s18 = int_to_ptr.vmem [resolvable:$true] %s17
      %20 = dma.hbm_to_vmem [thread:$0]  %s16, 128, %s18, [#allocation3]
    $region5: #{tpu_custom_call.1} parent=1 // pred_fallthru
      _
    // Predicated region
    $region6: #{tpu_custom_call.1} parent=1 // pred_check
      _
    $region7: #{tpu_custom_call.1} parent=1 // pred_check_branch
      %22 = sbr.rel (0) target = $region9
    $region8: #{tpu_custom_call.1} parent=1 // pred_region
      %24 = vsyncadd [#allocation6], 0
      %s26 = sshll.u32 %s1, 4
      %s27 = int_to_ptr.hbm [resolvable:$true] %s26
      %s28 = sshll.u32 [#allocation5], 4
      %s29 = int_to_ptr.vmem [resolvable:$true] %s28
      %31 = dma.hbm_to_vmem [thread:$0]  %s27, 128, %s29, [#allocation6]
    $region9: #{tpu_custom_call.1} parent=1 // pred_fallthru
      _
    // Predicated region
    $region10: #{tpu_custom_call.1} parent=1 // pred_check
      _
    $region11: #{tpu_custom_call.1} parent=1 // pred_check_branch
      %33 = sbr.rel (0) target = $region13
    $region12: #{tpu_custom_call.1} parent=1 // pred_region
      %35 = dma.done [#allocation3], 128
    $region13: #{tpu_custom_call.1} parent=1 // pred_fallthru
      _
    // Predicated region
    $region14: #{tpu_custom_call.1} parent=1 // pred_check
      _
    $region15: #{tpu_custom_call.1} parent=1 // pred_check_branch
      %37 = sbr.rel (0) target = $region17
    $region16: #{tpu_custom_call.1} parent=1 // pred_region
      %39 = dma.done [#allocation6], 128
    $region17: #{tpu_custom_call.1} parent=1 // pred_fallthru
      _
    %v40 = vld [vmem:[#allocation2] sm:$0xff]
    %v41 = vld [vmem:[#allocation5] sm:$0xff]
    %v42 = vlaneseq
    %v43 = vshrl.u32 %v42, 7
    %v44 = vadd.s32 %v43, 8
    %v45 = vlaneseq
    %v46 = vand.u32 %v45, 127
    %vm47 = vcmp.ge.s32.totalorder %v46, 2
    %v48 = vsel %vm47, 1, 0
    %vm49 = vcmp.ge.s32.totalorder %v46, 5
    %v50 = vsel %vm49, 1, 0
    %v51 = vadd.s32 %v48, %v50
    %vm52 = vcmp.ge.s32.totalorder %v46, 8
    %v53 = vsel %vm52, 1, 0
    %v54 = vadd.s32 %v51, %v53
    %vm55 = vcmp.ge.s32.totalorder %v46, 10
    %v56 = vsel %vm55, 1, 0
    %v57 = vadd.s32 %v54, %v56
    %vm58 = vcmp.ge.s32.totalorder %v46, 12
    %v59 = vsel %vm58, 1, 0
    %v60 = vadd.s32 %v57, %v59
    %vm61 = vcmp.ge.s32.totalorder %v46, 14
    %v62 = vsel %vm61, 1, 0
    %v63 = vadd.s32 %v60, %v62
    %vm64 = vcmp.ge.s32.totalorder %v46, 17
    %v65 = vsel %vm64, 1, 0
    %v66 = vadd.s32 %v63, %v65
    %vm67 = vcmp.ge.s32.totalorder %v46, 19
    %v68 = vsel %vm67, 1, 0
    %v69 = vadd.s32 %v66, %v68
    %vm70 = vcmp.ge.s32.totalorder %v46, 21
    %v71 = vsel %vm70, 1, 0
    %v72 = vadd.s32 %v69, %v71
    %vm73 = vcmp.ge.s32.totalorder %v46, 26
    %v74 = vsel %vm73, 1, 0
    %v75 = vadd.s32 %v72, %v74
    %vm76 = vcmp.ge.s32.totalorder %v46, 28
    %v77 = vsel %vm76, 1, 0
    %v78 = vadd.s32 %v75, %v77
    %vm79 = vcmp.eq.s32.totalorder %v43, %v78
    %vm80 = vcmp.eq.s32.totalorder %v44, %v78
    %v81 = vsel %vm79, 1, 0
    %v82 = vsel %vm80, 1, 0
    %v83 = vcvt.s32.f32 %v81
    %v84 = vcvt.s32.f32 %v82
    %v85 = vadd.s32 %v43, 16
    %v86 = vadd.s32 %v43, 24
    %vm87 = vcmp.ge.s32.totalorder %v43, 2
    %vm88 = vcmp.ge.s32.totalorder %v44, 2
    %vm89 = vcmp.ge.s32.totalorder %v85, 2
    %vm90 = vcmp.ge.s32.totalorder %v86, 2
    %v91 = vsel %vm87, 1, 0
    %v92 = vsel %vm88, 1, 0
    %v93 = vsel %vm89, 1, 0
    %v94 = vsel %vm90, 1, 0
    %vm95 = vcmp.ge.s32.totalorder %v43, 5
    %vm96 = vcmp.ge.s32.totalorder %v44, 5
    %vm97 = vcmp.ge.s32.totalorder %v85, 5
    %vm98 = vcmp.ge.s32.totalorder %v86, 5
    %v99 = vsel %vm95, 1, 0
    %v100 = vsel %vm96, 1, 0
    %v101 = vsel %vm97, 1, 0
    %v102 = vsel %vm98, 1, 0
    %v103 = vadd.s32 %v91, %v99
    %v104 = vadd.s32 %v92, %v100
    %v105 = vadd.s32 %v93, %v101
    %v106 = vadd.s32 %v94, %v102
    %vm107 = vcmp.ge.s32.totalorder %v43, 8
    %vm108 = vcmp.ge.s32.totalorder %v44, 8
    %vm109 = vcmp.ge.s32.totalorder %v85, 8
    %vm110 = vcmp.ge.s32.totalorder %v86, 8
    %v111 = vsel %vm107, 1, 0
    %v112 = vsel %vm108, 1, 0
    %v113 = vsel %vm109, 1, 0
    %v114 = vsel %vm110, 1, 0
    %v115 = vadd.s32 %v103, %v111
    %v116 = vadd.s32 %v104, %v112
    %v117 = vadd.s32 %v105, %v113
    %v118 = vadd.s32 %v106, %v114
    %vm119 = vcmp.ge.s32.totalorder %v43, 10
    %vm120 = vcmp.ge.s32.totalorder %v44, 10
    %vm121 = vcmp.ge.s32.totalorder %v85, 10
    %vm122 = vcmp.ge.s32.totalorder %v86, 10
    %v123 = vsel %vm119, 1, 0
    %v124 = vsel %vm120, 1, 0
    %v125 = vsel %vm121, 1, 0
    %v126 = vsel %vm122, 1, 0
    %v127 = vadd.s32 %v115, %v123
    %v128 = vadd.s32 %v116, %v124
    %v129 = vadd.s32 %v117, %v125
    %v130 = vadd.s32 %v118, %v126
    %vm131 = vcmp.ge.s32.totalorder %v43, 12
    %vm132 = vcmp.ge.s32.totalorder %v44, 12
    %vm133 = vcmp.ge.s32.totalorder %v85, 12
    %vm134 = vcmp.ge.s32.totalorder %v86, 12
    %v135 = vsel %vm131, 1, 0
    %v136 = vsel %vm132, 1, 0
    %v137 = vsel %vm133, 1, 0
    %v138 = vsel %vm134, 1, 0
    %v139 = vadd.s32 %v127, %v135
    %v140 = vadd.s32 %v128, %v136
    %v141 = vadd.s32 %v129, %v137
    %v142 = vadd.s32 %v130, %v138
    %vm143 = vcmp.ge.s32.totalorder %v43, 14
    %vm144 = vcmp.ge.s32.totalorder %v44, 14
    %vm145 = vcmp.ge.s32.totalorder %v85, 14
    %vm146 = vcmp.ge.s32.totalorder %v86, 14
    %v147 = vsel %vm143, 1, 0
    %v148 = vsel %vm144, 1, 0
    %v149 = vsel %vm145, 1, 0
    %v150 = vsel %vm146, 1, 0
    %v151 = vadd.s32 %v139, %v147
    %v152 = vadd.s32 %v140, %v148
    %v153 = vadd.s32 %v141, %v149
    %v154 = vadd.s32 %v142, %v150
    %vm155 = vcmp.ge.s32.totalorder %v43, 17
    %vm156 = vcmp.ge.s32.totalorder %v44, 17
    %vm157 = vcmp.ge.s32.totalorder %v85, 17
    %vm158 = vcmp.ge.s32.totalorder %v86, 17
    %v159 = vsel %vm155, 1, 0
    %v160 = vsel %vm156, 1, 0
    %v161 = vsel %vm157, 1, 0
    %v162 = vsel %vm158, 1, 0
    %v163 = vadd.s32 %v151, %v159
    %v164 = vadd.s32 %v152, %v160
    %v165 = vadd.s32 %v153, %v161
    %v166 = vadd.s32 %v154, %v162
    %vm167 = vcmp.ge.s32.totalorder %v43, 19
    %vm168 = vcmp.ge.s32.totalorder %v44, 19
    %vm169 = vcmp.ge.s32.totalorder %v85, 19
    %vm170 = vcmp.ge.s32.totalorder %v86, 19
    %v171 = vsel %vm167, 1, 0
    %v172 = vsel %vm168, 1, 0
    %v173 = vsel %vm169, 1, 0
    %v174 = vsel %vm170, 1, 0
    %v175 = vadd.s32 %v163, %v171
    %v176 = vadd.s32 %v164, %v172
    %v177 = vadd.s32 %v165, %v173
    %v178 = vadd.s32 %v166, %v174
    %vm179 = vcmp.ge.s32.totalorder %v43, 21
    %vm180 = vcmp.ge.s32.totalorder %v44, 21
    %vm181 = vcmp.ge.s32.totalorder %v85, 21
    %vm182 = vcmp.ge.s32.totalorder %v86, 21
    %v183 = vsel %vm179, 1, 0
    %v184 = vsel %vm180, 1, 0
    %v185 = vsel %vm181, 1, 0
    %v186 = vsel %vm182, 1, 0
    %v187 = vadd.s32 %v175, %v183
    %v188 = vadd.s32 %v176, %v184
    %v189 = vadd.s32 %v177, %v185
    %v190 = vadd.s32 %v178, %v186
    %vm191 = vcmp.ge.s32.totalorder %v43, 26
    %vm192 = vcmp.ge.s32.totalorder %v44, 26
    %vm193 = vcmp.ge.s32.totalorder %v85, 26
    %vm194 = vcmp.ge.s32.totalorder %v86, 26
    %v195 = vsel %vm191, 1, 0
    %v196 = vsel %vm192, 1, 0
    %v197 = vsel %vm193, 1, 0
    %v198 = vsel %vm194, 1, 0
    %v199 = vadd.s32 %v187, %v195
    %v200 = vadd.s32 %v188, %v196
    %v201 = vadd.s32 %v189, %v197
    %v202 = vadd.s32 %v190, %v198
    %vm203 = vcmp.ge.s32.totalorder %v43, 28
    %vm204 = vcmp.ge.s32.totalorder %v44, 28
    %vm205 = vcmp.ge.s32.totalorder %v85, 28
    %vm206 = vcmp.ge.s32.totalorder %v86, 28
    %v207 = vsel %vm203, 1, 0
    %v208 = vsel %vm204, 1, 0
    %v209 = vsel %vm205, 1, 0
    %v210 = vsel %vm206, 1, 0
    %v211 = vadd.s32 %v199, %v207
    %v212 = vadd.s32 %v200, %v208
    %v213 = vadd.s32 %v201, %v209
    %v214 = vadd.s32 %v202, %v210
    %vm215 = vcmp.eq.s32.totalorder %v211, %v78
    %vm216 = vcmp.eq.s32.totalorder %v212, %v78
    %vm217 = vcmp.eq.s32.totalorder %v213, %v78
    %vm218 = vcmp.eq.s32.totalorder %v214, %v78
    %v219 = vsel %vm215, 1, 0
    %v220 = vsel %vm216, 1, 0
    %v221 = vsel %vm217, 1, 0
    %v222 = vsel %vm218, 1, 0
    %v223 = vcvt.s32.f32 %v219
    %v224 = vcvt.s32.f32 %v220
    %v225 = vcvt.s32.f32 %v221
    %v226 = vcvt.s32.f32 %v222
    %vm227 = vcmask 15360
    %v228 = vsel %vm227, %v40, -inf
    %229 = vmax.xlane.f32.xlu0 %v228
    %v230 = vpop.xlane.xlu0 %229
    %vm231 = vcmask 39952
    %v232 = vsel %vm231, %v40, -inf
    %233 = vmax.xlane.f32.xlu0 %v232
    %v234 = vpop.xlane.xlu0 %233
    %vm235 = vcmask 64552
    %v236 = vsel %vm235, %v40, -inf
    %237 = vmax.xlane.f32.xlu0 %v236
    %v238 = vpop.xlane.xlu0 %237
    %vm239 = vcmask 80960
    %v240 = vsel %vm239, %v40, -inf
    %241 = vmax.xlane.f32.xlu0 %v240
    %v242 = vpop.xlane.xlu0 %241
    %vm243 = vcmask 97360
    %v244 = vsel %vm243, %v40, -inf
    %245 = vmax.xlane.f32.xlu0 %v244
    %v246 = vpop.xlane.xlu0 %245
    %vm247 = vcmask 113760
    %v248 = vsel %vm247, %v40, -inf
    %249 = vmax.xlane.f32.xlu0 %v248
    %v250 = vpop.xlane.xlu0 %249
    %vm251 = vcmask 138352
    %v252 = vsel %vm251, %v40, -inf
    %253 = vmax.xlane.f32.xlu0 %v252
    %v254 = vpop.xlane.xlu0 %253
    %vm255 = vcmask 154760
    %v256 = vsel %vm255, %v40, -inf
    %257 = vmax.xlane.f32.xlu0 %v256
    %v258 = vpop.xlane.xlu0 %257
    %vm259 = vcmask 171160
    %v260 = vsel %vm259, %v40, -inf
    %261 = vmax.xlane.f32.xlu0 %v260
    %v262 = vpop.xlane.xlu0 %261
    %vm263 = vcmask 212136
    %v264 = vsel %vm263, %v40, -inf
    %265 = vmax.xlane.f32.xlu0 %v264
    %v266 = vpop.xlane.xlu0 %265
    %vm267 = vcmask 228560
    %v268 = vsel %vm267, %v40, -inf
    %269 = vmax.xlane.f32.xlu0 %v268
    %v270 = vpop.xlane.xlu0 %269
    %vm271 = vcmask 244960
    %v272 = vsel %vm271, %v40, -inf
    %273 = vmax.xlane.f32.xlu0 %v272
    %v274 = vpop.xlane.xlu0 %273
    %vm275 = vcmask 7168
    %v276 = vsel %vm275, %v230, %v234
    %v277 = vsel %vm227, %v276, %v238
    %vm278 = vcmask 23552
    %v279 = vsel %vm278, %v277, %v242
    %vm280 = vcmask 31744
    %v281 = vsel %vm280, %v279, %v246
    %vm282 = vcmask 39936
    %v283 = vsel %vm282, %v281, %v250
    %vm284 = vcmask 48128
    %v285 = vsel %vm284, %v283, %v254
    %vm286 = vcmask 56320
    %v287 = vsel %vm286, %v285, %v258
    %vm288 = vcmask 64512
    %v289 = vsel %vm288, %v287, %v262
    %vm290 = vcmask 72704
    %v291 = vsel %vm290, %v289, %v266
    %vm292 = vcmask 80896
    %v293 = vsel %vm292, %v291, %v270
    %vm294 = vcmask 89088
    %v295 = vsel %vm294, %v293, %v274
    %vm296 = vcmask 97280
    %v298 = vsel %vm296, %v295, 0
    %vm300 = vcmask 1043456
    %v302 = vsel %vm300, %v84, 0
    %304 = vmatpush.msra.mxu0 0.0
    %305 = vmatpush.msra.mxu0 0.0
    %306 = vmatpush.msra.mxu0 0.0
    %307 = vmatpush.msra.mxu0 0.0
    %308 = vmatpush.msra.mxu0 0.0
    %309 = vmatpush.msra.mxu0 0.0
    %310 = vmatpush.msra.mxu0 0.0
    %311 = vmatpush.msra.mxu0 0.0
    %312 = vmatpush.msra.mxu0 0.0
    %313 = vmatpush.msra.mxu0 0.0
    %314 = vmatpush.msra.mxu0 0.0
    %315 = vmatpush.msra.mxu0 0.0
    %316 = vmatpush.msra.mxu0 0.0
    %317 = vmatpush.msra.mxu0 0.0
    %318 = vmatpush.msra.mxu0 %v302
    %319 = vmatpush.msra.mxu0 %v83
    %320 = vmatmul.f32.gmra.mxu0 %v298
    %v321 = vpop.f32.mrf.mxu0
    %v322 = vadd.f32 0.0, %v321
    %323 = vdwg.mxu0
    %v324 = vsub.f32 %v40, %v322
    %v325 = vmul.f32 %v324, 1.442695
    %v326 = vpow.pop %v325
    %v327 = vpack.c.bf16 %v326, %v326
    %v328 = vunpack.c.l.bf16 %v327
    %v329 = vsub.f32 %v326, %v328
    %vm330 = vcmask 244736
    %v332 = vsel %vm330, %v329, 0
    %vm334 = vcmask 1045504
    %v336 = vsel %vm334, %v226, 0
    %338 = vmatpush.msra.mxu0 0.0
    %339 = vmatpush.msra.mxu0 0.0
    %340 = vmatpush.msra.mxu0 0.0
    %341 = vmatpush.msra.mxu0 0.0
    %342 = vmatpush.msra.mxu0 0.0
    %343 = vmatpush.msra.mxu0 0.0
    %344 = vmatpush.msra.mxu0 0.0
    %345 = vmatpush.msra.mxu0 0.0
    %346 = vmatpush.msra.mxu0 0.0
    %347 = vmatpush.msra.mxu0 0.0
    %348 = vmatpush.msra.mxu0 0.0
    %349 = vmatpush.msra.mxu0 0.0
    %350 = vmatpush.msra.mxu0 %v336
    %351 = vmatpush.msra.mxu0 %v225
    %352 = vmatpush.msra.mxu0 %v224
    %353 = vmatpush.msra.mxu0 %v223
    %354 = vmatmul.f32.gmra.mxu0 %v332
    %v355 = vpop.f32.mrf.mxu0
    %v356 = vadd.f32 0.0, %v355
    %357 = vdwg.mxu0
    %v359 = vsel %vm330, %v328, 0
    %361 = vmatpush.msra.mxu0 0.0
    %362 = vmatpush.msra.mxu0 0.0
    %363 = vmatpush.msra.mxu0 0.0
    %364 = vmatpush.msra.mxu0 0.0
    %365 = vmatpush.msra.mxu0 0.0
    %366 = vmatpush.msra.mxu0 0.0
    %367 = vmatpush.msra.mxu0 0.0
    %368 = vmatpush.msra.mxu0 0.0
    %369 = vmatpush.msra.mxu0 0.0
    %370 = vmatpush.msra.mxu0 0.0
    %371 = vmatpush.msra.mxu0 0.0
    %372 = vmatpush.msra.mxu0 0.0
    %373 = vmatpush.msra.mxu0 %v336
    %374 = vmatpush.msra.mxu0 %v225
    %375 = vmatpush.msra.mxu0 %v224
    %376 = vmatpush.msra.mxu0 %v223
    %377 = vmatmul.f32.gmra.mxu0 %v359
    %v378 = vpop.f32.mrf.mxu0
    %v379 = vadd.f32 %v356, %v378
    %380 = vdwg.mxu0
    %v381 = vlog2.pop %v379
    %v382 = vmul.f32 %v381, 0.6931472
    %v383 = vsub.f32 %v382, %v324
    %v384 = vmul.f32 %v41, %v383
    %v385 = vsel %vm330, %v384, 0.0
    %386 = vadd.xlane.f32.xlu0 %v385
    %v387 = vpop.xlane.xlu0 %386
    %v388 = vrot.slane %v387, 4
    %v389 = vadd.f32 %v387, %v388
    %v390 = vrot.slane %v389, 2
    %v391 = vadd.f32 %v389, %v390
    %v392 = vrot.slane %v391, 1
    %v393 = vadd.f32 %v391, %v392
    %s394 = vtos %v393
    %p395 = scmp.eq.s32.totalorder 0, 0
    // Predicated region
    $region18: #{tpu_custom_call.1} parent=1 // pred_check
      %p396 = pneg %p395
    $region19: #{tpu_custom_call.1} parent=1 // pred_check_branch
      %398 = sbr.rel (%p396) target = $region21
    $region20: #{tpu_custom_call.1} parent=1 // pred_region
      %s399 = scalar_lea.smem [#allocation7], 0
      %400 = sst [smem:[%s399]] 0.0
    $region21: #{tpu_custom_call.1} parent=1 // pred_fallthru
      _
    %s401 = sld [smem:[#allocation7]]
    %s402 = smul.f32 %s394, 0.125
    %s403 = sadd.f32 %s401, %s402
    %s404 = scalar_lea.smem [#allocation7], 0
    %405 = sst [smem:[%s404]] %s403
    // Predicated region
    $region22: #{tpu_custom_call.1} parent=1 // pred_check
      _
    $region23: #{tpu_custom_call.1} parent=1 // pred_check_branch
      %407 = sbr.rel (0) target = $region25
    $region24: #{tpu_custom_call.1} parent=1 // pred_region
      %409 = vsyncadd [#allocation4], 0
      %s411 = sshll.u32 %s2, 4
      %s412 = int_to_ptr.hbm [resolvable:$true] %s411
      %414 = dma.smem_to_hbm [#allocation7], 16, %s412, [#allocation4]
    $region25: #{tpu_custom_call.1} parent=1 // pred_fallthru
      _
    // Predicated region
    $region26: #{tpu_custom_call.1} parent=1 // pred_check
      _
    $region27: #{tpu_custom_call.1} parent=1 // pred_check_branch
      %416 = sbr.rel (0) target = $region29
    $region28: #{tpu_custom_call.1} parent=1 // pred_region
      %418 = dma.done [#allocation4], 16
    $region29: #{tpu_custom_call.1} parent=1 // pred_fallthru
      _
    %419 = sfence
    %420 = vsyncpa [#allocation3], 1
    %421 = vsyncpa [#allocation6], 1
    %422 = vsyncpa [#allocation4], 1

</llo_original>
